<compile_context>
chip_gen: v7x
topology: tpu7x:2x2x1
jax: 0.10.0
libtpu: 0.0.40
codegen_flags: <defaults>
</compile_context>

<pallas_src>
import functools

import jax
import jax.numpy as jnp
from jax.experimental import pallas as pl
from jax.experimental.pallas import tpu as pltpu


# ----------------------------- config ------------------------------------
class QFNNConfig:
    epsilon = 1e-5
    threshold = 0.5
    alpha = 0.1
    r_min = 0.1
    r_max = 2.0
    radius_rate = 0.01
    dt_scale = 0.1
    beta = 0.1  # unused in forward (as in the PyTorch module)


CFG = QFNNConfig()

_F32 = jnp.float32
_MiB = 1024 * 1024

# mask rewrite:  1/(eps + |sim|) > thr   <=>   |sim| < 1/thr - eps
_MASK_BOUND = 1.0 / float(CFG.threshold) - float(CFG.epsilon)


@functools.lru_cache(maxsize=1)
def _vmem_budgets():
    """(vmem_limit_bytes, attention-slab budget bytes) per TPU generation.

    v5e/v6e: 128 MiB physical VMEM -> 64 MiB scoped limit, 10 MiB [TI,N] slab.
    v7x: only 64 MiB physical -> 48 MiB limit (headroom for Mosaic scratch and
    double-buffering) and a 5 MiB slab.  Unknown backends use the conservative
    (v7x) numbers.
    """
    try:
        info = pltpu.get_tpu_info()
        vmem = int(getattr(info, "vmem_capacity_bytes", 0) or 0)
    except Exception:
        vmem = 0
    if vmem >= 96 * _MiB:
        return 64 * _MiB, 10 * _MiB
    return 48 * _MiB, 5 * _MiB


def _choose_row_tile(N, slab_budget):
    """Query rows per grid step; the per-step attention slab is [TI, N] f32.

    TI sits on the sublane axis, so it must be a multiple of 8 or the full
    dimension N.
    """
    row_bytes = N * 4
    ti = slab_budget // max(row_bytes, 1)
    if ti >= N:
        return N
    return min(N, max(8, (ti // 8) * 8))


# ----------------------------- kernels ------------------------------------
def _attn_rows(rows, c0, c1):
    """Attention rows for one (batch, row-tile) grid step.

    rows  : [TI, 2]  query states
    c0,c1 : [1, N]   alpha-folded key planes (c0 = x0 + a*x1, c1 = x1 - a*x0)
    returns attn [TI, N] (f32)
    """
    eps = _F32(CFG.epsilon)
    a0 = rows[:, 0:1]                         # [TI, 1]
    a1 = rows[:, 1:2]
    # alpha folded into the key planes: 3 VALU ops/element instead of 7
    sim = a0 * c0 + a1 * c1                   # [TI, N]
    abs_sim = jnp.abs(sim)
    denom = eps + abs_sim
    # EUP reciprocal + one Newton step (~f32-exact) instead of a VALU divide;
    # the mask is computed directly on |sim| so it never sees the reciprocal.
    inv = pl.reciprocal(denom, approx=True)
    inv = inv * (_F32(2.0) - denom * inv)
    return jnp.where(abs_sim < _F32(_MASK_BOUND), sim * inv, _F32(0.0))


def _attn_ctx_kernel(planes_ref, rows_ref, attn_ref, ctx_ref, asum_ref):
    # planes_ref: [4, N]   rows 0,1 = alpha-folded key planes; rows 2,3 = x0,x1
    # rows_ref  : [TI, 2]  query rows of this grid step
    # attn_ref  : [TI, N]  attention rows (lane-dense store: last dim = N)
    # ctx_ref   : [TI, 2]  context rows
    # asum_ref  : [TI, 1]  attention row sums (for the radius update)
    attn_ref[...] = _attn_rows(rows_ref[...],
                               planes_ref[0:1, :], planes_ref[1:2, :])
    # Re-read the stored output block so Mosaic does not keep a second
    # slab-sized temporary alive for the contraction input.
    attn = attn_ref[...]
    x0 = planes_ref[2:3, :]
    x1 = planes_ref[3:4, :]
    # K=N contraction as lane reductions (XLU slot, exact f32).  The output is
    # only a few lanes wide, so this beats an MXU matmul that would need f32
    # operand splitting (Precision.HIGHEST) over the big [TI,N] LHS.
    ctx_ref[:, 0:1] = jnp.sum(attn * x0, axis=-1, keepdims=True)
    ctx_ref[:, 1:2] = jnp.sum(attn * x1, axis=-1, keepdims=True)
    asum_ref[...] = jnp.sum(attn, axis=-1, keepdims=True)


def _mid_ctx_kernel(planes_ref, rows_ref, ctx_ref):
    # Heun midpoint pass: same attention math, only the context is needed.
    attn = _attn_rows(rows_ref[...], planes_ref[0:1, :], planes_ref[1:2, :])
    ctx_ref[:, 0:1] = jnp.sum(attn * planes_ref[2:3, :], axis=-1, keepdims=True)
    ctx_ref[:, 1:2] = jnp.sum(attn * planes_ref[3:4, :], axis=-1, keepdims=True)


def _finalize_kernel(st_ref, ev_ref, asum_ref, out_ref):
    # Single-block epilogue over the O(B*N) state planes: the global max over
    # the phase distance (torch.max) must see the whole batch at once.
    eps = _F32(CFG.epsilon)
    rate = _F32(CFG.radius_rate)

    x0 = st_ref[0]
    x1 = st_ref[1]
    e0 = ev_ref[0]
    e1 = ev_ref[1]

    # superposition skip connection (global max over the whole batch)
    pd = jnp.sqrt((x0 - e0) ** 2 + (x1 - e1) ** 2 + eps)
    max_d = jnp.max(pd)
    skip = 1.0 - pd / (max_d + eps)
    n0 = skip * x0 + (1.0 - skip) * e0
    n1 = skip * x1 + (1.0 - skip) * e1

    # radius adjustment (uses the attention row-sums from the *first* pass)
    radii = jnp.sqrt(n0 * n0 + n1 * n1)
    new_radii = jnp.clip(radii + asum_ref[...] * rate,
                         _F32(CFG.r_min), _F32(CFG.r_max))
    scale = new_radii / (radii + _F32(1e-8))

    out_ref[0] = n0 * scale
    out_ref[1] = n1 * scale


# ----------------------------- wrapper ------------------------------------
@jax.jit
def qfnn_layer(states):
    """states: [B, N, 2] f32 -> (new_states [B, N, 2], attention [B, N, N])."""
    states = states.astype(_F32)
    B, N, _ = states.shape
    vmem_limit, slab_budget = _vmem_budgets()
    TI = _choose_row_tile(N, slab_budget)
    # Batch axis in the grid keeps both v7x TensorCores busy even when a
    # single row tile covers all of N (small/medium problems).
    grid = (B, pl.cdiv(N, TI))
    dt = _F32(CFG.dt_scale)
    alpha = _F32(CFG.alpha)

    def key_planes(s):
        # [B,N,2] -> [B,4,N]: alpha-folded key planes + raw value planes, with
        # the token axis on TPU lanes.  O(B*N) layout glue, negligible.
        x0 = s[..., 0]
        x1 = s[..., 1]
        return jnp.stack([x0 + alpha * x1, x1 - alpha * x0, x0, x1], axis=1)

    planes = key_planes(states)                         # [B,4,N]

    tiled_params = pltpu.CompilerParams(
        dimension_semantics=("parallel", "parallel"),
        vmem_limit_bytes=vmem_limit)

    planes_spec = pl.BlockSpec((None, 4, N), lambda b, i: (b, 0, 0))
    rows_spec = pl.BlockSpec((None, TI, 2), lambda b, i: (b, i, 0))
    attn_spec = pl.BlockSpec((None, TI, N), lambda b, i: (b, i, 0))
    ctx_spec = pl.BlockSpec((None, TI, 2), lambda b, i: (b, i, 0))
    asum_spec = pl.BlockSpec((None, TI, 1), lambda b, i: (b, i, 0))

    # ---- stage A: attention rows + context + row-sums (first pass) --------
    attn, ctx, asum = pl.pallas_call(
        _attn_ctx_kernel,
        grid=grid,
        in_specs=[planes_spec, rows_spec],
        out_specs=(attn_spec, ctx_spec, asum_spec),
        out_shape=(jax.ShapeDtypeStruct((B, N, N), _F32),
                   jax.ShapeDtypeStruct((B, N, 2), _F32),
                   jax.ShapeDtypeStruct((B, N, 1), _F32)),
        compiler_params=tiled_params,
    )(planes, states)

    # ---- Heun-Euler midpoint (O(B*N) glue; needs the full first context) --
    k1 = dt * ctx
    mid = states + k1                                   # [B,N,2]
    mid_planes = key_planes(mid)                        # [B,4,N]

    # ---- stage B: context at the midpoint (attention matrix not stored) ---
    mid_ctx = pl.pallas_call(
        _mid_ctx_kernel,
        grid=grid,
        in_specs=[planes_spec, rows_spec],
        out_specs=ctx_spec,
        out_shape=jax.ShapeDtypeStruct((B, N, 2), _F32),
        compiler_params=tiled_params,
    )(mid_planes, mid)

    k2 = dt * mid_ctx
    evolved = states + 0.5 * (k1 + k2)                  # [B,N,2]

    # ---- stage C: superposition skip (global max) + radius adjustment -----
    states_t = jnp.transpose(states, (2, 0, 1))         # [2,B,N]
    evolved_t = jnp.transpose(evolved, (2, 0, 1))
    attn_sum = asum[..., 0]                             # [B,N]

    plane_spec = pl.BlockSpec((2, B, N), lambda i: (0, 0, 0))
    vec_spec = pl.BlockSpec((B, N), lambda i: (0, 0))
    new_t = pl.pallas_call(
        _finalize_kernel,
        grid=(1,),
        in_specs=[plane_spec, plane_spec, vec_spec],
        out_specs=plane_spec,
        out_shape=jax.ShapeDtypeStruct((2, B, N), _F32),
        compiler_params=pltpu.CompilerParams(
            dimension_semantics=("arbitrary",),
            vmem_limit_bytes=vmem_limit),
    )(states_t, evolved_t, attn_sum)

    new_states = jnp.transpose(new_t, (1, 2, 0))        # [B,N,2]
    return new_states, attn


# ----------------------------- reference (plain JAX, for sanity) ----------
def qfnn_layer_ref(states):
    eps, thr, alpha = CFG.epsilon, CFG.threshold, CFG.alpha
    dt, rate = CFG.dt_scale, CFG.radius_rate

    def attention_fn(s):
        direct = jnp.einsum('bik,bjk->bij', s, s, precision='highest')
        s_orth = jnp.stack([s[..., 1], -s[..., 0]], axis=-1)
        ortho = jnp.einsum('bik,bjk->bij', s, s_orth, precision='highest')
        sim = direct + alpha * ortho
        gate = 1.0 / (eps + jnp.abs(sim))
        mask = (gate > thr).astype(sim.dtype)
        attn = sim * mask * gate
        ctx = jnp.einsum('bij,bjk->bik', attn, s, precision='highest')
        return attn, ctx

    attn, ctx = attention_fn(states)
    k1 = dt * ctx
    _, mid_ctx = attention_fn(states + k1)
    k2 = dt * mid_ctx
    evolved = states + 0.5 * (k1 + k2)
    pd = jnp.sqrt(jnp.sum((states - evolved) ** 2, axis=-1, keepdims=True) + eps)
    max_d = jnp.max(pd)
    skip = 1.0 - pd / (max_d + eps)
    new_states = skip * states + (1.0 - skip) * evolved

    radii = jnp.linalg.norm(new_states, axis=2, keepdims=True)
    attn_sum = jnp.sum(attn, axis=2, keepdims=True)
    new_radii = jnp.clip(radii + attn_sum * rate, CFG.r_min, CFG.r_max)
    scale = new_radii / (radii + 1e-8)
    return new_states * scale, attn


# ----------------------------- main ---------------------------------------
if __name__ == "__main__":
    key = jax.random.PRNGKey(0)
    B, N = 2, 8
    states = jax.random.normal(key, (B, N, 2), dtype=jnp.float32)

    new_states, attention = qfnn_layer(states)
    jax.block_until_ready((new_states, attention))

    # correctness check against plain-JAX reference of the PyTorch math
    ref_states, ref_attn = qfnn_layer_ref(states)
    assert jnp.allclose(attention, ref_attn, atol=1e-4, rtol=1e-4), float(
        jnp.max(jnp.abs(attention - ref_attn)))
    assert jnp.allclose(new_states, ref_states, atol=1e-4, rtol=1e-4), float(
        jnp.max(jnp.abs(new_states - ref_states)))

    print("KERNEL_OK")
</pallas_src>

<mosaic_0001>
module attributes {stable_mosaic.version = 11 : i64} {
  func.func @_attn_ctx_kernel(%arg0: i32, %arg1: i32, %arg2: memref<1x4x8xf32, #tpu.memory_space<vmem>>, %arg3: memref<1x8x2xf32, #tpu.memory_space<vmem>>, %arg4: memref<1x8x8xf32, #tpu.memory_space<vmem>>, %arg5: memref<1x8x2xf32, #tpu.memory_space<vmem>>, %arg6: memref<1x8x1xf32, #tpu.memory_space<vmem>>) attributes {dimension_semantics = [#tpu.dimension_semantics<parallel>, #tpu.dimension_semantics<parallel>], iteration_bounds = array<i64: 2, 1>, scalar_prefetch = 0 : i64, scratch_operands = 0 : i64, tpu.core_type = #tpu.core_type<tc>, window_params = [{transform_indices = @transform_0, window_bounds = array<i64: 1, 4, 8>}, {transform_indices = @transform_1, window_bounds = array<i64: 1, 8, 2>}, {transform_indices = @transform_2, window_bounds = array<i64: 1, 8, 8>}, {transform_indices = @transform_3, window_bounds = array<i64: 1, 8, 2>}, {transform_indices = @transform_4, window_bounds = array<i64: 1, 8, 1>}]} {
    %c0 = arith.constant 0 : index
    %c0_0 = arith.constant 0 : index
    %c0_1 = arith.constant 0 : index
    %0 = vector.load %arg3[%c0, %c0_0, %c0_1] : memref<1x8x2xf32, #tpu.memory_space<vmem>>, vector<1x8x2xf32>
    %1 = vector.shape_cast %0 : vector<1x8x2xf32> to vector<8x2xf32>
    %c0_2 = arith.constant 0 : index
    %c0_3 = arith.constant 0 : index
    %c0_4 = arith.constant 0 : index
    %2 = vector.load %arg2[%c0_2, %c0_3, %c0_4] : memref<1x4x8xf32, #tpu.memory_space<vmem>>, vector<1x1x8xf32>
    %3 = vector.shape_cast %2 : vector<1x1x8xf32> to vector<1x8xf32>
    %c0_5 = arith.constant 0 : index
    %c1 = arith.constant 1 : index
    %c0_6 = arith.constant 0 : index
    %4 = vector.load %arg2[%c0_5, %c1, %c0_6] : memref<1x4x8xf32, #tpu.memory_space<vmem>>, vector<1x1x8xf32>
    %5 = vector.shape_cast %4 : vector<1x1x8xf32> to vector<1x8xf32>
    %6 = vector.extract_strided_slice %1 {offsets = [0, 0], sizes = [8, 1], strides = [1, 1]} : vector<8x2xf32> to vector<8x1xf32>
    %7 = vector.extract_strided_slice %1 {offsets = [0, 1], sizes = [8, 1], strides = [1, 1]} : vector<8x2xf32> to vector<8x1xf32>
    %8 = vector.broadcast %6 : vector<8x1xf32> to vector<8x8xf32>
    %9 = vector.broadcast %3 : vector<1x8xf32> to vector<8x8xf32>
    %10 = arith.mulf %8, %9 : vector<8x8xf32>
    %11 = vector.broadcast %7 : vector<8x1xf32> to vector<8x8xf32>
    %12 = vector.broadcast %5 : vector<1x8xf32> to vector<8x8xf32>
    %13 = arith.mulf %11, %12 : vector<8x8xf32>
    %14 = arith.addf %10, %13 : vector<8x8xf32>
    %15 = math.absf %14 : vector<8x8xf32>
    %cst = arith.constant 9.99999974E-6 : f32
    %16 = vector.broadcast %cst : f32 to vector<8x8xf32>
    %17 = arith.addf %16, %15 : vector<8x8xf32>
    %18 = tpu.reciprocal %17 {approx = true} : vector<8x8xf32> -> vector<8x8xf32>
    %19 = arith.mulf %17, %18 : vector<8x8xf32>
    %cst_7 = arith.constant 2.000000e+00 : f32
    %20 = vector.broadcast %cst_7 : f32 to vector<8x8xf32>
    %21 = arith.subf %20, %19 : vector<8x8xf32>
    %22 = arith.mulf %18, %21 : vector<8x8xf32>
    %cst_8 = arith.constant 1.999990e+00 : f32
    %23 = vector.broadcast %cst_8 : f32 to vector<8x8xf32>
    %24 = arith.cmpf olt, %15, %23 : vector<8x8xf32>
    %25 = arith.mulf %14, %22 : vector<8x8xf32>
    %cst_9 = arith.constant 0.000000e+00 : f32
    %26 = vector.broadcast %cst_9 : f32 to vector<8x8xf32>
    %27 = arith.select %24, %25, %26 : vector<8x8xi1>, vector<8x8xf32>
    %c0_10 = arith.constant 0 : index
    %c0_11 = arith.constant 0 : index
    %c0_12 = arith.constant 0 : index
    %28 = vector.load %arg4[%c0_10, %c0_11, %c0_12] : memref<1x8x8xf32, #tpu.memory_space<vmem>>, vector<1x8x8xf32>
    %29 = vector.shape_cast %28 : vector<1x8x8xf32> to vector<8x8xf32>
    %30 = vector.shape_cast %27 : vector<8x8xf32> to vector<1x8x8xf32>
    tpu.vector_store %arg4[%c0_10, %c0_11, %c0_12], %30 {strides = array<i32>} : memref<1x8x8xf32, #tpu.memory_space<vmem>>, vector<1x8x8xf32>,
    %c0_13 = arith.constant 0 : index
    %c0_14 = arith.constant 0 : index
    %c0_15 = arith.constant 0 : index
    %31 = vector.load %arg4[%c0_13, %c0_14, %c0_15] : memref<1x8x8xf32, #tpu.memory_space<vmem>>, vector<1x8x8xf32>
    %32 = vector.shape_cast %31 : vector<1x8x8xf32> to vector<8x8xf32>
    %c0_16 = arith.constant 0 : index
    %c2 = arith.constant 2 : index
    %c0_17 = arith.constant 0 : index
    %33 = vector.load %arg2[%c0_16, %c2, %c0_17] : memref<1x4x8xf32, #tpu.memory_space<vmem>>, vector<1x1x8xf32>
    %34 = vector.shape_cast %33 : vector<1x1x8xf32> to vector<1x8xf32>
    %c0_18 = arith.constant 0 : index
    %c3 = arith.constant 3 : index
    %c0_19 = arith.constant 0 : index
    %35 = vector.load %arg2[%c0_18, %c3, %c0_19] : memref<1x4x8xf32, #tpu.memory_space<vmem>>, vector<1x1x8xf32>
    %36 = vector.shape_cast %35 : vector<1x1x8xf32> to vector<1x8xf32>
    %37 = vector.broadcast %34 : vector<1x8xf32> to vector<8x8xf32>
    %38 = arith.mulf %32, %37 : vector<8x8xf32>
    %cst_20 = arith.constant dense<0.000000e+00> : vector<8xf32>
    %39 = vector.multi_reduction <add>, %38, %cst_20 [1] : vector<8x8xf32> to vector<8xf32>
    %40 = vector.shape_cast %39 : vector<8xf32> to vector<8x1xf32>
    %c0_21 = arith.constant 0 : index
    %c0_22 = arith.constant 0 : index
    %c0_23 = arith.constant 0 : index
    %41 = vector.load %arg5[%c0_21, %c0_22, %c0_23] : memref<1x8x2xf32, #tpu.memory_space<vmem>>, vector<1x8x1xf32>
    %42 = vector.shape_cast %41 : vector<1x8x1xf32> to vector<8x1xf32>
    %43 = vector.shape_cast %40 : vector<8x1xf32> to vector<1x8x1xf32>
    tpu.vector_store %arg5[%c0_21, %c0_22, %c0_23], %43 {strides = array<i32>} : memref<1x8x2xf32, #tpu.memory_space<vmem>>, vector<1x8x1xf32>,
    %44 = vector.broadcast %36 : vector<1x8xf32> to vector<8x8xf32>
    %45 = arith.mulf %32, %44 : vector<8x8xf32>
    %cst_24 = arith.constant dense<0.000000e+00> : vector<8xf32>
    %46 = vector.multi_reduction <add>, %45, %cst_24 [1] : vector<8x8xf32> to vector<8xf32>
    %47 = vector.shape_cast %46 : vector<8xf32> to vector<8x1xf32>
    %c0_25 = arith.constant 0 : index
    %c0_26 = arith.constant 0 : index
    %c1_27 = arith.constant 1 : index
    %48 = vector.load %arg5[%c0_25, %c0_26, %c1_27] : memref<1x8x2xf32, #tpu.memory_space<vmem>>, vector<1x8x1xf32>
    %49 = vector.shape_cast %48 : vector<1x8x1xf32> to vector<8x1xf32>
    %50 = vector.shape_cast %47 : vector<8x1xf32> to vector<1x8x1xf32>
    tpu.vector_store %arg5[%c0_25, %c0_26, %c1_27], %50 {strides = array<i32>} : memref<1x8x2xf32, #tpu.memory_space<vmem>>, vector<1x8x1xf32>,
    %cst_28 = arith.constant dense<0.000000e+00> : vector<8xf32>
    %51 = vector.multi_reduction <add>, %32, %cst_28 [1] : vector<8x8xf32> to vector<8xf32>
    %52 = vector.shape_cast %51 : vector<8xf32> to vector<8x1xf32>
    %c0_29 = arith.constant 0 : index
    %c0_30 = arith.constant 0 : index
    %c0_31 = arith.constant 0 : index
    %53 = vector.load %arg6[%c0_29, %c0_30, %c0_31] : memref<1x8x1xf32, #tpu.memory_space<vmem>>, vector<1x8x1xf32>
    %54 = vector.shape_cast %53 : vector<1x8x1xf32> to vector<8x1xf32>
    %55 = vector.shape_cast %52 : vector<8x1xf32> to vector<1x8x1xf32>
    tpu.vector_store %arg6[%c0_29, %c0_30, %c0_31], %55 {strides = array<i32>} : memref<1x8x1xf32, #tpu.memory_space<vmem>>, vector<1x8x1xf32>,
    return
  }
  func.func @transform_0(%arg0: i32, %arg1: i32) -> (i32, i32, i32) {
    %c0_i32 = arith.constant 0 : i32
    %c0_i32_0 = arith.constant 0 : i32
    %c0_i32_1 = arith.constant 0 : i32
    return %arg0, %c0_i32, %c0_i32_0 : i32, i32, i32
  }
  func.func @transform_1(%arg0: i32, %arg1: i32) -> (i32, i32, i32) {
    %c0_i32 = arith.constant 0 : i32
    %c0_i32_0 = arith.constant 0 : i32
    return %arg0, %arg1, %c0_i32 : i32, i32, i32
  }
  func.func @transform_2(%arg0: i32, %arg1: i32) -> (i32, i32, i32) {
    %c0_i32 = arith.constant 0 : i32
    %c0_i32_0 = arith.constant 0 : i32
    return %arg0, %arg1, %c0_i32 : i32, i32, i32
  }
  func.func @transform_3(%arg0: i32, %arg1: i32) -> (i32, i32, i32) {
    %c0_i32 = arith.constant 0 : i32
    %c0_i32_0 = arith.constant 0 : i32
    return %arg0, %arg1, %c0_i32 : i32, i32, i32
  }
  func.func @transform_4(%arg0: i32, %arg1: i32) -> (i32, i32, i32) {
    %c0_i32 = arith.constant 0 : i32
    %c0_i32_0 = arith.constant 0 : i32
    return %arg0, %arg1, %c0_i32 : i32, i32, i32
  }
}

module attributes {stable_mosaic.version = 11 : i64} {
  func.func @_mid_ctx_kernel(%arg0: i32, %arg1: i32, %arg2: memref<1x4x8xf32, #tpu.memory_space<vmem>>, %arg3: memref<1x8x2xf32, #tpu.memory_space<vmem>>, %arg4: memref<1x8x2xf32, #tpu.memory_space<vmem>>) attributes {dimension_semantics = [#tpu.dimension_semantics<parallel>, #tpu.dimension_semantics<parallel>], iteration_bounds = array<i64: 2, 1>, scalar_prefetch = 0 : i64, scratch_operands = 0 : i64, tpu.core_type = #tpu.core_type<tc>, window_params = [{transform_indices = @transform_0, window_bounds = array<i64: 1, 4, 8>}, {transform_indices = @transform_1, window_bounds = array<i64: 1, 8, 2>}, {transform_indices = @transform_2, window_bounds = array<i64: 1, 8, 2>}]} {
    %c0 = arith.constant 0 : index
    %c0_0 = arith.constant 0 : index
    %c0_1 = arith.constant 0 : index
    %0 = vector.load %arg3[%c0, %c0_0, %c0_1] : memref<1x8x2xf32, #tpu.memory_space<vmem>>, vector<1x8x2xf32>
    %1 = vector.shape_cast %0 : vector<1x8x2xf32> to vector<8x2xf32>
    %c0_2 = arith.constant 0 : index
    %c0_3 = arith.constant 0 : index
    %c0_4 = arith.constant 0 : index
    %2 = vector.load %arg2[%c0_2, %c0_3, %c0_4] : memref<1x4x8xf32, #tpu.memory_space<vmem>>, vector<1x1x8xf32>
    %3 = vector.shape_cast %2 : vector<1x1x8xf32> to vector<1x8xf32>
    %c0_5 = arith.constant 0 : index
    %c1 = arith.constant 1 : index
    %c0_6 = arith.constant 0 : index
    %4 = vector.load %arg2[%c0_5, %c1, %c0_6] : memref<1x4x8xf32, #tpu.memory_space<vmem>>, vector<1x1x8xf32>
    %5 = vector.shape_cast %4 : vector<1x1x8xf32> to vector<1x8xf32>
    %6 = vector.extract_strided_slice %1 {offsets = [0, 0], sizes = [8, 1], strides = [1, 1]} : vector<8x2xf32> to vector<8x1xf32>
    %7 = vector.extract_strided_slice %1 {offsets = [0, 1], sizes = [8, 1], strides = [1, 1]} : vector<8x2xf32> to vector<8x1xf32>
    %8 = vector.broadcast %6 : vector<8x1xf32> to vector<8x8xf32>
    %9 = vector.broadcast %3 : vector<1x8xf32> to vector<8x8xf32>
    %10 = arith.mulf %8, %9 : vector<8x8xf32>
    %11 = vector.broadcast %7 : vector<8x1xf32> to vector<8x8xf32>
    %12 = vector.broadcast %5 : vector<1x8xf32> to vector<8x8xf32>
    %13 = arith.mulf %11, %12 : vector<8x8xf32>
    %14 = arith.addf %10, %13 : vector<8x8xf32>
    %15 = math.absf %14 : vector<8x8xf32>
    %cst = arith.constant 9.99999974E-6 : f32
    %16 = vector.broadcast %cst : f32 to vector<8x8xf32>
    %17 = arith.addf %16, %15 : vector<8x8xf32>
    %18 = tpu.reciprocal %17 {approx = true} : vector<8x8xf32> -> vector<8x8xf32>
    %19 = arith.mulf %17, %18 : vector<8x8xf32>
    %cst_7 = arith.constant 2.000000e+00 : f32
    %20 = vector.broadcast %cst_7 : f32 to vector<8x8xf32>
    %21 = arith.subf %20, %19 : vector<8x8xf32>
    %22 = arith.mulf %18, %21 : vector<8x8xf32>
    %cst_8 = arith.constant 1.999990e+00 : f32
    %23 = vector.broadcast %cst_8 : f32 to vector<8x8xf32>
    %24 = arith.cmpf olt, %15, %23 : vector<8x8xf32>
    %25 = arith.mulf %14, %22 : vector<8x8xf32>
    %cst_9 = arith.constant 0.000000e+00 : f32
    %26 = vector.broadcast %cst_9 : f32 to vector<8x8xf32>
    %27 = arith.select %24, %25, %26 : vector<8x8xi1>, vector<8x8xf32>
    %c0_10 = arith.constant 0 : index
    %c2 = arith.constant 2 : index
    %c0_11 = arith.constant 0 : index
    %28 = vector.load %arg2[%c0_10, %c2, %c0_11] : memref<1x4x8xf32, #tpu.memory_space<vmem>>, vector<1x1x8xf32>
    %29 = vector.shape_cast %28 : vector<1x1x8xf32> to vector<1x8xf32>
    %30 = vector.broadcast %29 : vector<1x8xf32> to vector<8x8xf32>
    %31 = arith.mulf %27, %30 : vector<8x8xf32>
    %cst_12 = arith.constant dense<0.000000e+00> : vector<8xf32>
    %32 = vector.multi_reduction <add>, %31, %cst_12 [1] : vector<8x8xf32> to vector<8xf32>
    %33 = vector.shape_cast %32 : vector<8xf32> to vector<8x1xf32>
    %c0_13 = arith.constant 0 : index
    %c0_14 = arith.constant 0 : index
    %c0_15 = arith.constant 0 : index
    %34 = vector.load %arg4[%c0_13, %c0_14, %c0_15] : memref<1x8x2xf32, #tpu.memory_space<vmem>>, vector<1x8x1xf32>
    %35 = vector.shape_cast %34 : vector<1x8x1xf32> to vector<8x1xf32>
    %36 = vector.shape_cast %33 : vector<8x1xf32> to vector<1x8x1xf32>
    tpu.vector_store %arg4[%c0_13, %c0_14, %c0_15], %36 {strides = array<i32>} : memref<1x8x2xf32, #tpu.memory_space<vmem>>, vector<1x8x1xf32>,
    %c0_16 = arith.constant 0 : index
    %c3 = arith.constant 3 : index
    %c0_17 = arith.constant 0 : index
    %37 = vector.load %arg2[%c0_16, %c3, %c0_17] : memref<1x4x8xf32, #tpu.memory_space<vmem>>, vector<1x1x8xf32>
    %38 = vector.shape_cast %37 : vector<1x1x8xf32> to vector<1x8xf32>
    %39 = vector.broadcast %38 : vector<1x8xf32> to vector<8x8xf32>
    %40 = arith.mulf %27, %39 : vector<8x8xf32>
    %cst_18 = arith.constant dense<0.000000e+00> : vector<8xf32>
    %41 = vector.multi_reduction <add>, %40, %cst_18 [1] : vector<8x8xf32> to vector<8xf32>
    %42 = vector.shape_cast %41 : vector<8xf32> to vector<8x1xf32>
    %c0_19 = arith.constant 0 : index
    %c0_20 = arith.constant 0 : index
    %c1_21 = arith.constant 1 : index
    %43 = vector.load %arg4[%c0_19, %c0_20, %c1_21] : memref<1x8x2xf32, #tpu.memory_space<vmem>>, vector<1x8x1xf32>
    %44 = vector.shape_cast %43 : vector<1x8x1xf32> to vector<8x1xf32>
    %45 = vector.shape_cast %42 : vector<8x1xf32> to vector<1x8x1xf32>
    tpu.vector_store %arg4[%c0_19, %c0_20, %c1_21], %45 {strides = array<i32>} : memref<1x8x2xf32, #tpu.memory_space<vmem>>, vector<1x8x1xf32>,
    return
  }
  func.func @transform_0(%arg0: i32, %arg1: i32) -> (i32, i32, i32) {
    %c0_i32 = arith.constant 0 : i32
    %c0_i32_0 = arith.constant 0 : i32
    %c0_i32_1 = arith.constant 0 : i32
    return %arg0, %c0_i32, %c0_i32_0 : i32, i32, i32
  }
  func.func @transform_1(%arg0: i32, %arg1: i32) -> (i32, i32, i32) {
    %c0_i32 = arith.constant 0 : i32
    %c0_i32_0 = arith.constant 0 : i32
    return %arg0, %arg1, %c0_i32 : i32, i32, i32
  }
  func.func @transform_2(%arg0: i32, %arg1: i32) -> (i32, i32, i32) {
    %c0_i32 = arith.constant 0 : i32
    %c0_i32_0 = arith.constant 0 : i32
    return %arg0, %arg1, %c0_i32 : i32, i32, i32
  }
}

module attributes {stable_mosaic.version = 11 : i64} {
  func.func @_finalize_kernel(%arg0: i32, %arg1: memref<2x2x8xf32, #tpu.memory_space<vmem>>, %arg2: memref<2x2x8xf32, #tpu.memory_space<vmem>>, %arg3: memref<2x8xf32, #tpu.memory_space<vmem>>, %arg4: memref<2x2x8xf32, #tpu.memory_space<vmem>>) attributes {dimension_semantics = [#tpu.dimension_semantics<arbitrary>], iteration_bounds = array<i64: 1>, scalar_prefetch = 0 : i64, scratch_operands = 0 : i64, tpu.core_type = #tpu.core_type<tc>, window_params = [{pipeline_mode = #tpu.pipeline_mode<synchronous>, transform_indices = @transform_0, window_bounds = array<i64: 2, 2, 8>}, {pipeline_mode = #tpu.pipeline_mode<synchronous>, transform_indices = @transform_1, window_bounds = array<i64: 2, 2, 8>}, {pipeline_mode = #tpu.pipeline_mode<synchronous>, transform_indices = @transform_2, window_bounds = array<i64: 2, 8>}, {pipeline_mode = #tpu.pipeline_mode<synchronous>, transform_indices = @transform_3, window_bounds = array<i64: 2, 2, 8>}]} {
    %c0 = arith.constant 0 : index
    %c0_0 = arith.constant 0 : index
    %c0_1 = arith.constant 0 : index
    %0 = vector.load %arg1[%c0, %c0_0, %c0_1] : memref<2x2x8xf32, #tpu.memory_space<vmem>>, vector<1x2x8xf32>
    %1 = vector.shape_cast %0 : vector<1x2x8xf32> to vector<2x8xf32>
    %c1 = arith.constant 1 : index
    %c0_2 = arith.constant 0 : index
    %c0_3 = arith.constant 0 : index
    %2 = vector.load %arg1[%c1, %c0_2, %c0_3] : memref<2x2x8xf32, #tpu.memory_space<vmem>>, vector<1x2x8xf32>
    %3 = vector.shape_cast %2 : vector<1x2x8xf32> to vector<2x8xf32>
    %c0_4 = arith.constant 0 : index
    %c0_5 = arith.constant 0 : index
    %c0_6 = arith.constant 0 : index
    %4 = vector.load %arg2[%c0_4, %c0_5, %c0_6] : memref<2x2x8xf32, #tpu.memory_space<vmem>>, vector<1x2x8xf32>
    %5 = vector.shape_cast %4 : vector<1x2x8xf32> to vector<2x8xf32>
    %c1_7 = arith.constant 1 : index
    %c0_8 = arith.constant 0 : index
    %c0_9 = arith.constant 0 : index
    %6 = vector.load %arg2[%c1_7, %c0_8, %c0_9] : memref<2x2x8xf32, #tpu.memory_space<vmem>>, vector<1x2x8xf32>
    %7 = vector.shape_cast %6 : vector<1x2x8xf32> to vector<2x8xf32>
    %8 = arith.subf %1, %5 : vector<2x8xf32>
    %9 = arith.mulf %8, %8 : vector<2x8xf32>
    %10 = arith.subf %3, %7 : vector<2x8xf32>
    %11 = arith.mulf %10, %10 : vector<2x8xf32>
    %12 = arith.addf %9, %11 : vector<2x8xf32>
    %cst = arith.constant 9.99999974E-6 : f32
    %13 = vector.broadcast %cst : f32 to vector<2x8xf32>
    %14 = arith.addf %12, %13 : vector<2x8xf32>
    %15 = math.sqrt %14 : vector<2x8xf32>
    %16 = vector.shape_cast %15 : vector<2x8xf32> to vector<1x2x8xf32>
    %cst_10 = arith.constant dense<0xFF800000> : vector<1xf32>
    %17 = vector.multi_reduction <maximumf>, %16, %cst_10 [1, 2] : vector<1x2x8xf32> to vector<1xf32>
    %18 = vector.shape_cast %17 : vector<1xf32> to vector<1x1x1xf32>
    %19 = vector.extract %18[0, 0, 0] : f32 from vector<1x1x1xf32>
    %cst_11 = arith.constant 9.99999974E-6 : f32
    %20 = arith.addf %19, %cst_11 : f32
    %21 = vector.broadcast %20 : f32 to vector<2x8xf32>
    %22 = arith.divf %15, %21 : vector<2x8xf32>
    %cst_12 = arith.constant 1.000000e+00 : f32
    %23 = vector.broadcast %cst_12 : f32 to vector<2x8xf32>
    %24 = arith.subf %23, %22 : vector<2x8xf32>
    %25 = arith.mulf %24, %1 : vector<2x8xf32>
    %cst_13 = arith.constant 1.000000e+00 : f32
    %26 = vector.broadcast %cst_13 : f32 to vector<2x8xf32>
    %27 = arith.subf %26, %24 : vector<2x8xf32>
    %28 = arith.mulf %27, %5 : vector<2x8xf32>
    %29 = arith.addf %25, %28 : vector<2x8xf32>
    %30 = arith.mulf %24, %3 : vector<2x8xf32>
    %cst_14 = arith.constant 1.000000e+00 : f32
    %31 = vector.broadcast %cst_14 : f32 to vector<2x8xf32>
    %32 = arith.subf %31, %24 : vector<2x8xf32>
    %33 = arith.mulf %32, %7 : vector<2x8xf32>
    %34 = arith.addf %30, %33 : vector<2x8xf32>
    %35 = arith.mulf %29, %29 : vector<2x8xf32>
    %36 = arith.mulf %34, %34 : vector<2x8xf32>
    %37 = arith.addf %35, %36 : vector<2x8xf32>
    %38 = math.sqrt %37 : vector<2x8xf32>
    %c0_15 = arith.constant 0 : index
    %c0_16 = arith.constant 0 : index
    %39 = vector.load %arg3[%c0_15, %c0_16] : memref<2x8xf32, #tpu.memory_space<vmem>>, vector<2x8xf32>
    %cst_17 = arith.constant 0.00999999977 : f32
    %40 = vector.broadcast %cst_17 : f32 to vector<2x8xf32>
    %41 = arith.mulf %39, %40 : vector<2x8xf32>
    %42 = arith.addf %38, %41 : vector<2x8xf32>
    %cst_18 = arith.constant 1.000000e-01 : f32
    %cst_19 = arith.constant 2.000000e+00 : f32
    %43 = vector.broadcast %cst_18 : f32 to vector<2x8xf32>
    %44 = arith.maximumf %43, %42 : vector<2x8xf32>
    %45 = vector.broadcast %cst_19 : f32 to vector<2x8xf32>
    %46 = arith.minimumf %45, %44 : vector<2x8xf32>
    %cst_20 = arith.constant 9.99999993E-9 : f32
    %47 = vector.broadcast %cst_20 : f32 to vector<2x8xf32>
    %48 = arith.addf %38, %47 : vector<2x8xf32>
    %49 = arith.divf %46, %48 : vector<2x8xf32>
    %50 = arith.mulf %29, %49 : vector<2x8xf32>
    %c0_21 = arith.constant 0 : index
    %c0_22 = arith.constant 0 : index
    %c0_23 = arith.constant 0 : index
    %51 = vector.load %arg4[%c0_21, %c0_22, %c0_23] : memref<2x2x8xf32, #tpu.memory_space<vmem>>, vector<1x2x8xf32>
    %52 = vector.shape_cast %51 : vector<1x2x8xf32> to vector<2x8xf32>
    %53 = vector.shape_cast %50 : vector<2x8xf32> to vector<1x2x8xf32>
    tpu.vector_store %arg4[%c0_21, %c0_22, %c0_23], %53 {strides = array<i32>} : memref<2x2x8xf32, #tpu.memory_space<vmem>>, vector<1x2x8xf32>,
    %54 = arith.mulf %34, %49 : vector<2x8xf32>
    %c1_24 = arith.constant 1 : index
    %c0_25 = arith.constant 0 : index
    %c0_26 = arith.constant 0 : index
    %55 = vector.load %arg4[%c1_24, %c0_25, %c0_26] : memref<2x2x8xf32, #tpu.memory_space<vmem>>, vector<1x2x8xf32>
    %56 = vector.shape_cast %55 : vector<1x2x8xf32> to vector<2x8xf32>
    %57 = vector.shape_cast %54 : vector<2x8xf32> to vector<1x2x8xf32>
    tpu.vector_store %arg4[%c1_24, %c0_25, %c0_26], %57 {strides = array<i32>} : memref<2x2x8xf32, #tpu.memory_space<vmem>>, vector<1x2x8xf32>,
    return
  }
  func.func @transform_0(%arg0: i32) -> (i32, i32, i32) {
    %c0_i32 = arith.constant 0 : i32
    %c0_i32_0 = arith.constant 0 : i32
    %c0_i32_1 = arith.constant 0 : i32
    %c0_i32_2 = arith.constant 0 : i32
    return %c0_i32, %c0_i32_0, %c0_i32_1 : i32, i32, i32
  }
  func.func @transform_1(%arg0: i32) -> (i32, i32, i32) {
    %c0_i32 = arith.constant 0 : i32
    %c0_i32_0 = arith.constant 0 : i32
    %c0_i32_1 = arith.constant 0 : i32
    %c0_i32_2 = arith.constant 0 : i32
    return %c0_i32, %c0_i32_0, %c0_i32_1 : i32, i32, i32
  }
  func.func @transform_2(%arg0: i32) -> (i32, i32) {
    %c0_i32 = arith.constant 0 : i32
    %c0_i32_0 = arith.constant 0 : i32
    %c0_i32_1 = arith.constant 0 : i32
    return %c0_i32, %c0_i32_0 : i32, i32
  }
  func.func @transform_3(%arg0: i32) -> (i32, i32, i32) {
    %c0_i32 = arith.constant 0 : i32
    %c0_i32_0 = arith.constant 0 : i32
    %c0_i32_1 = arith.constant 0 : i32
    %c0_i32_2 = arith.constant 0 : i32
    return %c0_i32, %c0_i32_0, %c0_i32_1 : i32, i32, i32
  }
}

</mosaic_0001>

<llo_original>
// kernel: qfnn_layer.5
$region0: #{qfnn_layer.5}
  #allocation0 [shape = 'u32[]', space=smem, size = 0x4, offset = 0x4, fixed_abs, tag = 'smem constant byte address 0x4 - core index']
  #allocation1 [shape = 'u32[144,128]{1,0:T(1,128)}', space=vmem, size = 0x12000, scoped, tag = 'internal scratch']
  %s0 = inlined_call_operand.vmem [shape: f32[2,2,8], index: 0, kind: input, shape index: {}]
  %s1 = inlined_call_operand.vmem [shape: f32[2,2,8], index: 1, kind: input, shape index: {}]
  %s2 = inlined_call_operand.vmem [shape: f32[2,8], index: 2, kind: input, shape index: {}]
  %s3 = inlined_call_operand.vmem [shape: f32[2,2,8], index: 3, kind: output, shape index: {}]
  %s4 = sld [smem:[#allocation0]]
  $region22: #{qfnn_layer.5} parent=0
    _
  %s6 = ssub.s32 1, %s4
  %s7 = scalar_select 0, %s6, %s4
  // Predicated region
  $region2: #{qfnn_layer.5} parent=0 // pred_check
    _
  $region3: #{qfnn_layer.5} parent=0 // pred_check_branch
    %9 = sbr.rel (0) target = $region5
  $region4: #{qfnn_layer.5} parent=0 // pred_region
    _
  $region5: #{qfnn_layer.5} parent=0 // pred_fallthru
    _
  // Predicated region
  $region6: #{qfnn_layer.5} parent=0 // pred_check
    _
  $region7: #{qfnn_layer.5} parent=0 // pred_check_branch
    %11 = sbr.rel (0) target = $region9
  $region8: #{qfnn_layer.5} parent=0 // pred_region
    _
  $region9: #{qfnn_layer.5} parent=0 // pred_fallthru
    _
  // Predicated region
  $region10: #{qfnn_layer.5} parent=0 // pred_check
    _
  $region11: #{qfnn_layer.5} parent=0 // pred_check_branch
    %13 = sbr.rel (0) target = $region13
  $region12: #{qfnn_layer.5} parent=0 // pred_region
    _
  $region13: #{qfnn_layer.5} parent=0 // pred_fallthru
    _
  %v14 = vld [vmem:[%s0] sm:$0x3]
  %s15 = scalar_lea.vmem %s0, 2
  %v16 = vld [vmem:[%s15] sm:$0x3]
  %v17 = vld [vmem:[%s1] sm:$0x3]
  %s18 = scalar_lea.vmem %s1, 2
  %v19 = vld [vmem:[%s18] sm:$0x3]
  %v20 = vsub.f32 %v14, %v17
  %v21 = vmul.f32 %v20, %v20
  %v22 = vsub.f32 %v16, %v19
  %v23 = vmul.f32 %v22, %v22
  %v24 = vadd.f32 %v21, %v23
  %v25 = vadd.f32 %v24, 1e-05
  %v26 = vrsqrt.pop %v25
  %v27 = vmul.f32 %v25, %v26
  %vm28 = vcmp.eq.f32.partialorder %v25, inf
  %v29 = vsel %vm28, %v25, %v27
  %vm30 = vcmp.eq.f32.partialorder %v25, 0.0
  %v31 = vand.u32 %v25, 2147483648
  %v32 = vsel %vm30, %v31, %v29
  %vm33 = vcmask 58368
  %v34 = vsel %vm33, %v32, -inf
  %35 = vmax.xlane.f32.xlu0 %v34
  %v36 = vpop.xlane.xlu0 %35
  %v37 = vrot.slane %v36, 4
  %v38 = vmax.f32 %v36, %v37
  %v39 = vrot.slane %v38, 2
  %v40 = vmax.f32 %v38, %v39
  %v41 = vrot.slane %v40, 1
  %v42 = vmax.f32 %v40, %v41
  %s43 = vtos %v42
  %s44 = sadd.f32 %s43, 1e-05
  %v45 = vstv %s44
  %v46 = vrcp.pop %v45
  %v47 = vmul.f32 %v32, %v46
  %v48 = vsub.f32 1.0, %v47
  %v49 = vmul.f32 %v48, %v14
  %v50 = vsub.f32 1.0, %v48
  %v51 = vmul.f32 %v50, %v17
  %v52 = vadd.f32 %v49, %v51
  %v53 = vmul.f32 %v48, %v16
  %v54 = vmul.f32 %v50, %v19
  %v55 = vadd.f32 %v53, %v54
  %v56 = vmul.f32 %v52, %v52
  %v57 = vmul.f32 %v55, %v55
  %v58 = vadd.f32 %v56, %v57
  %v59 = vrsqrt.pop %v58
  %v60 = vmul.f32 %v58, %v59
  %vm61 = vcmp.eq.f32.partialorder %v58, inf
  %v62 = vsel %vm61, %v58, %v60
  %vm63 = vcmp.eq.f32.partialorder %v58, 0.0
  %v64 = vand.u32 %v58, 2147483648
  %v65 = vsel %vm63, %v64, %v62
  %v66 = vld [vmem:[%s2] sm:$0x3]
  %v67 = vmul.f32 %v66, 0.01
  %v68 = vadd.f32 %v65, %v67
  %v69 = vmax.f32 %v68, 0.1
  %v70 = vmin.f32 %v69, 2.0
  %v71 = vadd.f32 %v65, 1e-08
  %v72 = vrcp.pop %v71
  %v73 = vmul.f32 %v70, %v72
  %v74 = vmul.f32 %v52, %v73
  %75 = vst.msk [vmem:[%s3] sm:$0x3] %vm33, %v74
  %v76 = vmul.f32 %v55, %v73
  %s77 = scalar_lea.vmem %s3, 2
  %78 = vst.msk [vmem:[%s77] sm:$0x3] %vm33, %v76
  // Predicated region
  $region14: #{qfnn_layer.5} parent=0 // pred_check
    _
  $region15: #{qfnn_layer.5} parent=0 // pred_check_branch
    %80 = sbr.rel (0) target = $region17
  $region16: #{qfnn_layer.5} parent=0 // pred_region
    _
  $region17: #{qfnn_layer.5} parent=0 // pred_fallthru
    _
  // Predicated region
  $region18: #{qfnn_layer.5} parent=0 // pred_check
    _
  $region19: #{qfnn_layer.5} parent=0 // pred_check_branch
    %82 = sbr.rel (0) target = $region21
  $region20: #{qfnn_layer.5} parent=0 // pred_region
    _
  $region21: #{qfnn_layer.5} parent=0 // pred_fallthru
    _

// kernel: qfnn_layer.3
$region0: #{qfnn_layer.3}
  #allocation0 [shape = 'u32[]', space=smem, size = 0x4, offset = 0x4, fixed_abs, tag = 'smem constant byte address 0x4 - core index']
  #allocation1 [shape = 'u32[144,128]{1,0:T(1,128)}', space=vmem, size = 0x12000, scoped, tag = 'internal scratch']
  %s0 = inlined_call_operand.vmem [shape: f32[2,4,8], index: 0, kind: input, shape index: {}]
  %s1 = inlined_call_operand.vmem [shape: f32[2,8,2], index: 1, kind: input, shape index: {}]
  %s2 = inlined_call_operand.hbm [shape: f32[2,8,8], index: 2, kind: output, shape index: {0}]
  %s3 = inlined_call_operand.vmem [shape: f32[2,8,2], index: 3, kind: output, shape index: {1}]
  %s4 = inlined_call_operand.vmem [shape: f32[2,8,1], index: 4, kind: output, shape index: {2}]
  %5 = xla_tuple %s2, %s3, %s4
  %s6 = sld [smem:[#allocation0]]
  $region57: #{qfnn_layer.3} parent=0
    _
  %s8 = ssub.s32 1, %s6
  %s9 = scalar_select 0, %s8, %s6
  $region1: #{qfnn_layer.3} parent=0
    #allocation2 [shape = 'u8[8192]{0}', space=vmem, size = 0x2000, scoped, tag = 'output window, operand 0']
    #allocation3 [shape = 's32[2]{0}', space=sflag, size = 0x8, scoped, tag = 'scoped memory for qfnn_layer.3']
    %10 = vsyncpa [#allocation3], 0
    %s11 = scalar_lea.sflag [#allocation3], 1
    %12 = vsyncpa %s11, 0
    loop: start=0, step=1, limit=4
    $region2: #{qfnn_layer.3} parent=1 // loop_pre_header
      _
    $region3: #{qfnn_layer.3} parent=1 // loop_header
      %s14 = sphi 0, %s18
      %p15 = scmp.ge.s32.totalorder %s14, 4
      %s21 = sphi 0, %s33
      %s22 = sphi 0, %s29
      %s23 = sphi 0, %s21
      %s24 = sphi 0, %s22
      %s25 = sphi 0, %s23
      %s26 = sphi 0, %s24
      %s36 = sphi 0, %s38
      %s39 = sphi 0, %s36
      %s40 = sphi 0, %s39
      %s56 = sphi 0, %s40
      %s64 = sphi 0, %s66
      %s67 = sphi 0, %s64
      %s68 = sphi 0, %s67
      %s84 = sphi 0, %s68
      %s92 = sphi 0, %s94
      %s95 = sphi 0, %s92
      %s96 = sphi 0, %s95
      %s112 = sphi 0, %s96
      %s120 = sphi 0, %s122
      %s123 = sphi 0, %s120
      %s124 = sphi 0, %s123
      %s140 = sphi 0, %s124
      %s148 = sphi 0, %s150
      %s151 = sphi 0, %s148
      %s152 = sphi 0, %s151
      %s168 = sphi 0, %s152
    $region4: #{qfnn_layer.3} parent=1 // loop_header_branch
      %17 = sbr.rel (%p15) target = $region8
    $region5: #{qfnn_layer.3} parent=1 // loop_body
      %s19 = ssub.s32 %s14, 1
      %s20 = ssub.s32 %s14, 2
      %s27 = sadd.s32 1, %s22
      %p28 = scmp.ge.s32.totalorder %s27, 1
      %s29 = scalar_select %p28, 0, %s27
      %s30 = sadd.s32 1, %s21
      %s31 = scalar_select %p28, %s30, %s21
      %p32 = scmp.ge.s32.totalorder %s31, 2
      %s33 = scalar_select %p32, 0, %s31
      %s34 = ssub.s32 %s21, %s33
      %p35 = scmp.eq.s32.totalorder %s34, 0
      %s37 = sadd.s32 %s36, 1
      %s38 = scalar_select %p35, %s36, %s37
      %p41 = pneg %p35
      %p42 = scmp.eq.s32.totalorder %s14, 1
      %p43 = por %p41, %p42
      %p44 = scmp.ne.s32.totalorder %s36, %s39
      %p45 = scmp.eq.s32.totalorder %s14, 0
      %p46 = por %p44, %p45
      %p47 = scmp.ne.s32.totalorder %s36, %s39
      %p48 = scmp.eq.s32.totalorder %s19, 1
      %p49 = por %p47, %p48
      %p50 = scmp.ne.s32.totalorder %s39, %s40
      %p51 = scmp.eq.s32.totalorder %s19, 0
      %p52 = por %p50, %p51
      %p53 = scmp.ne.s32.totalorder %s39, %s40
      %p54 = scmp.eq.s32.totalorder %s20, 1
      %p55 = por %p53, %p54
      %p57 = scmp.ne.s32.totalorder %s40, %s56
      %p58 = scmp.eq.s32.totalorder %s20, 0
      %p59 = por %p57, %p58
      %s60 = ssub.s32 %s21, %s33
      %s61 = ssub.s32 %s22, %s29
      %s62 = sor.u32 %s60, %s61
      %p63 = scmp.eq.s32.totalorder %s62, 0
      %s65 = sadd.s32 %s64, 1
      %s66 = scalar_select %p63, %s64, %s65
      %p69 = pneg %p63
      %p70 = scmp.eq.s32.totalorder %s14, 1
      %p71 = por %p69, %p70
      %p72 = scmp.ne.s32.totalorder %s64, %s67
      %p73 = scmp.eq.s32.totalorder %s14, 0
      %p74 = por %p72, %p73
      %p75 = scmp.ne.s32.totalorder %s64, %s67
      %p76 = scmp.eq.s32.totalorder %s19, 1
      %p77 = por %p75, %p76
      %p78 = scmp.ne.s32.totalorder %s67, %s68
      %p79 = scmp.eq.s32.totalorder %s19, 0
      %p80 = por %p78, %p79
      %p81 = scmp.ne.s32.totalorder %s67, %s68
      %p82 = scmp.eq.s32.totalorder %s20, 1
      %p83 = por %p81, %p82
      %p85 = scmp.ne.s32.totalorder %s68, %s84
      %p86 = scmp.eq.s32.totalorder %s20, 0
      %p87 = por %p85, %p86
      %s88 = ssub.s32 %s21, %s33
      %s89 = ssub.s32 %s22, %s29
      %s90 = sor.u32 %s88, %s89
      %p91 = scmp.eq.s32.totalorder %s90, 0
      %s93 = sadd.s32 %s92, 1
      %s94 = scalar_select %p91, %s92, %s93
      %p97 = pneg %p91
      %p98 = scmp.eq.s32.totalorder %s14, 1
      %p99 = por %p97, %p98
      %p100 = scmp.ne.s32.totalorder %s92, %s95
      %p101 = scmp.eq.s32.totalorder %s14, 0
      %p102 = por %p100, %p101
      %p103 = scmp.ne.s32.totalorder %s92, %s95
      %p104 = scmp.eq.s32.totalorder %s19, 1
      %p105 = por %p103, %p104
      %p106 = scmp.ne.s32.totalorder %s95, %s96
      %p107 = scmp.eq.s32.totalorder %s19, 0
      %p108 = por %p106, %p107
      %p109 = scmp.ne.s32.totalorder %s95, %s96
      %p110 = scmp.eq.s32.totalorder %s20, 1
      %p111 = por %p109, %p110
      %p113 = scmp.ne.s32.totalorder %s96, %s112
      %p114 = scmp.eq.s32.totalorder %s20, 0
      %p115 = por %p113, %p114
      %s116 = ssub.s32 %s21, %s33
      %s117 = ssub.s32 %s22, %s29
      %s118 = sor.u32 %s116, %s117
      %p119 = scmp.eq.s32.totalorder %s118, 0
      %s121 = sadd.s32 %s120, 1
      %s122 = scalar_select %p119, %s120, %s121
      %p125 = pneg %p119
      %p126 = scmp.eq.s32.totalorder %s14, 1
      %p127 = por %p125, %p126
      %p128 = scmp.ne.s32.totalorder %s120, %s123
      %p129 = scmp.eq.s32.totalorder %s14, 0
      %p130 = por %p128, %p129
      %p131 = scmp.ne.s32.totalorder %s120, %s123
      %p132 = scmp.eq.s32.totalorder %s19, 1
      %p133 = por %p131, %p132
      %p134 = scmp.ne.s32.totalorder %s123, %s124
      %p135 = scmp.eq.s32.totalorder %s19, 0
      %p136 = por %p134, %p135
      %p137 = scmp.ne.s32.totalorder %s123, %s124
      %p138 = scmp.eq.s32.totalorder %s20, 1
      %p139 = por %p137, %p138
      %p141 = scmp.ne.s32.totalorder %s124, %s140
      %p142 = scmp.eq.s32.totalorder %s20, 0
      %p143 = por %p141, %p142
      %s144 = ssub.s32 %s21, %s33
      %s145 = ssub.s32 %s22, %s29
      %s146 = sor.u32 %s144, %s145
      %p147 = scmp.eq.s32.totalorder %s146, 0
      %s149 = sadd.s32 %s148, 1
      %s150 = scalar_select %p147, %s148, %s149
      %p153 = pneg %p147
      %p154 = scmp.eq.s32.totalorder %s14, 1
      %p155 = por %p153, %p154
      %p156 = scmp.ne.s32.totalorder %s148, %s151
      %p157 = scmp.eq.s32.totalorder %s14, 0
      %p158 = por %p156, %p157
      %p159 = scmp.ne.s32.totalorder %s148, %s151
      %p160 = scmp.eq.s32.totalorder %s19, 1
      %p161 = por %p159, %p160
      %p162 = scmp.ne.s32.totalorder %s151, %s152
      %p163 = scmp.eq.s32.totalorder %s19, 0
      %p164 = por %p162, %p163
      %p165 = scmp.ne.s32.totalorder %s151, %s152
      %p166 = scmp.eq.s32.totalorder %s20, 1
      %p167 = por %p165, %p166
      %p169 = scmp.ne.s32.totalorder %s152, %s168
      %p170 = scmp.eq.s32.totalorder %s20, 0
      %p171 = por %p169, %p170
      %p172 = scmp.le.s32.totalorder 1, %s14
      %p173 = scmp.lt.s32.totalorder %s14, 3
      %p174 = pnand %p172, %p173
      %p175 = pneg %p174
      // Predicated region
      $region9: #{qfnn_layer.3} parent=5 // pred_check
        _
      $region10: #{qfnn_layer.3} parent=5 // pred_check_branch
        %177 = sbr.rel (%p174) target = $region12
      $region11: #{qfnn_layer.3} parent=5 // pred_region
        %s178 = ssub.s32 %s14, 1
      $region12: #{qfnn_layer.3} parent=5 // pred_fallthru
        _
      %p179 = scmp.lt.s32.totalorder %s14, 2
      // Predicated region
      $region13: #{qfnn_layer.3} parent=5 // pred_check
        %p180 = pneg %p179
      $region14: #{qfnn_layer.3} parent=5 // pred_check_branch
        %182 = sbr.rel (%p180) target = $region16
      $region15: #{qfnn_layer.3} parent=5 // pred_region
        // Predicated region
        $region17: #{qfnn_layer.3} parent=15 // pred_check
          %p183 = pneg %p46
        $region18: #{qfnn_layer.3} parent=15 // pred_check_branch
          %185 = sbr.rel (%p183) target = $region20
        $region19: #{qfnn_layer.3} parent=15 // pred_region
          %p186 = scmp.lt.s32.totalorder %s21, 1
          %s187 = scalar_select %p186, %s21, 1
          %s188 = smul.addr %s187, 4
          %s189 = scalar_lea.vmem %s0, %s188
        $region20: #{qfnn_layer.3} parent=15 // pred_fallthru
          _
        // Predicated region
        $region21: #{qfnn_layer.3} parent=15 // pred_check
          %p190 = pneg %p74
        $region22: #{qfnn_layer.3} parent=15 // pred_check_branch
          %192 = sbr.rel (%p190) target = $region24
        $region23: #{qfnn_layer.3} parent=15 // pred_region
          %p193 = scmp.lt.s32.totalorder %s21, 1
          %s194 = scalar_select %p193, %s21, 1
          %p195 = scmp.lt.s32.totalorder %s22, 0
          %s196 = scalar_select %p195, %s22, 0
          %s197 = sadd.s32 %s196, %s194
          %s198 = smul.addr %s197, 8
          %s199 = scalar_lea.vmem %s1, %s198
        $region24: #{qfnn_layer.3} parent=15 // pred_fallthru
          _
      $region16: #{qfnn_layer.3} parent=5 // pred_fallthru
        _
      %p200 = scmp.le.s32.totalorder 1, %s14
      %p201 = scmp.lt.s32.totalorder %s14, 3
      %p202 = pnand %p200, %p201
      %p203 = pneg %p202
      // Predicated region
      $region25: #{qfnn_layer.3} parent=5 // pred_check
        _
      $region26: #{qfnn_layer.3} parent=5 // pred_check_branch
        %205 = sbr.rel (%p202) target = $region28
      $region27: #{qfnn_layer.3} parent=5 // pred_region
        %s206 = ssub.s32 %s14, 1
        %p207 = scmp.lt.s32.totalorder %s23, 1
        %s208 = scalar_select %p207, %s23, 1
        %s209 = smul.addr %s208, 4
        %s210 = scalar_lea.vmem %s0, %s209
        %p211 = pneg %p52
        %p212 = pneg %p49
        %p213 = scmp.lt.s32.totalorder %s23, 1
        %s214 = scalar_select %p213, %s23, 1
        %p215 = scmp.lt.s32.totalorder %s24, 0
        %s216 = scalar_select %p215, %s24, 0
        %s217 = sadd.s32 %s216, %s214
        %s218 = smul.addr %s217, 8
        %s219 = scalar_lea.vmem %s1, %s218
        %p220 = pneg %p80
        %p221 = pneg %p77
        %p222 = pneg %p108
        %p223 = pneg %p105
        %s224 = sand.u32 %s95, 1
        %s225 = scalar_lea.sflag [#allocation3], %s224
        %s226 = sand.u32 %s95, 1
        %s227 = smul.addr %s226, 8
        %s228 = scalar_lea.vmem [#allocation2], %s227
        %p229 = pneg %p136
        %p230 = pneg %p133
        %p231 = scmp.lt.s32.totalorder %s23, 1
        %s232 = scalar_select %p231, %s23, 1
        %p233 = scmp.lt.s32.totalorder %s24, 0
        %s234 = scalar_select %p233, %s24, 0
        %s235 = sadd.s32 %s234, %s232
        %s236 = smul.addr %s235, 8
        %s237 = scalar_lea.vmem %s3, %s236
        %p238 = pneg %p164
        %p239 = pneg %p161
        %p240 = scmp.lt.s32.totalorder %s23, 1
        %s241 = scalar_select %p240, %s23, 1
        %p242 = scmp.lt.s32.totalorder %s24, 0
        %s243 = scalar_select %p242, %s24, 0
        %s244 = sadd.s32 %s243, %s241
        %s245 = smul.addr %s244, 8
        %s246 = scalar_lea.vmem %s4, %s245
        %p247 = scmp.lt.s32.totalorder %s23, 1
        %s248 = scalar_select %p247, %s23, 1
        %s249 = smul.addr %s248, 4
        %s250 = scalar_lea.vmem %s0, %s249
        %p251 = scmp.lt.s32.totalorder %s23, 1
        %s252 = scalar_select %p251, %s23, 1
        %p253 = scmp.lt.s32.totalorder %s24, 0
        %s254 = scalar_select %p253, %s24, 0
        %s255 = sadd.s32 %s254, %s252
        %s256 = smul.addr %s255, 8
        %s257 = scalar_lea.vmem %s1, %s256
        %p258 = scmp.lt.s32.totalorder %s23, 1
        %s259 = scalar_select %p258, %s23, 1
        %p260 = scmp.lt.s32.totalorder %s24, 0
        %s261 = scalar_select %p260, %s24, 0
        %s262 = sadd.s32 %s261, %s259
        %s263 = smul.addr %s262, 8
        %s264 = scalar_lea.vmem %s3, %s263
        %p265 = scmp.lt.s32.totalorder %s23, 1
        %s266 = scalar_select %p265, %s23, 1
        %p267 = scmp.lt.s32.totalorder %s24, 0
        %s268 = scalar_select %p267, %s24, 0
        %s269 = sadd.s32 %s268, %s266
        %s270 = smul.addr %s269, 8
        %s271 = scalar_lea.vmem %s4, %s270
        %v272 = vld [vmem:[%s257] sm:$0xff]
        %v273 = vld [vmem:[%s250] sm:$0x1]
        %v274 = vld [vmem:[%s250 + $0x1] sm:$0x1]
        %276 = vset.pattern.permute.xlu0 0
        %277 = vperm.xlu0 %276, %v272
        %v278 = vpop.permute.xlu0 %277
        %v280 = vlaneseq
        %v281 = vshrl.u32 %v280, 7
        %v282 = vsub.s32 0, %v281
        %v283 = vrot.slane %v273, %v282
        %v284 = vmul.f32 %v278, %v283
        %285 = vset.pattern.permute.xlu0 1
        %286 = vperm.xlu0 %285, %v272
        %v287 = vpop.permute.xlu0 %286
        %v289 = vlaneseq
        %v290 = vshrl.u32 %v289, 7
        %v291 = vsub.s32 0, %v290
        %v292 = vrot.slane %v274, %v291
        %v293 = vmul.f32 %v287, %v292
        %v294 = vadd.f32 %v284, %v293
        %v295 = vand.u32 2147483647, %v294
        %v296 = vadd.f32 %v295, 1e-05
        %v297 = vrcp.pop %v296
        %v298 = vmul.f32 %v296, %v297
        %v299 = vsub.f32 2.0, %v298
        %v300 = vmul.f32 %v297, %v299
        %vm301 = vcmp.lt.f32.partialorder %v295, 1.99999
        %v302 = vmul.f32 %v294, %v300
        %v303 = vsel %vm301, %v302, 0.0
        %vm304 = vcmask 64512
        %305 = vst.msk [vmem:[%s228] sm:$0xff] %vm304, %v303
        %v306 = vld [vmem:[%s228] sm:$0xff]
        %v307 = vld [vmem:[%s250 + $0x2] sm:$0x1]
        %v308 = vld [vmem:[%s250 + $0x3] sm:$0x1]
        %v309 = vlaneseq
        %v310 = vshrl.u32 %v309, 7
        %v311 = vsub.s32 0, %v310
        %v312 = vrot.slane %v307, %v311
        %v313 = vmul.f32 %v306, %v312
        %v314 = vsel %vm304, %v313, 0.0
        %315 = vadd.xlane.f32.xlu0 %v314
        %v316 = vpop.xlane.xlu0 %315
        %vm317 = vcmask 7168
        %318 = vst.msk [vmem:[%s264] sm:$0xff] %vm317, %v316
        %v319 = vlaneseq
        %v320 = vshrl.u32 %v319, 7
        %v321 = vsub.s32 0, %v320
        %v322 = vrot.slane %v308, %v321
        %v323 = vmul.f32 %v306, %v322
        %v324 = vsel %vm304, %v323, 0.0
        %325 = vadd.xlane.f32.xlu0 %v324
        %v326 = vpop.xlane.xlu0 %325
        %vm327 = vcmask 15368
        %328 = vst.msk [vmem:[%s264] sm:$0xff] %vm327, %v326
        %v329 = vsel %vm304, %v306, 0.0
        %330 = vadd.xlane.f32.xlu0 %v329
        %v331 = vpop.xlane.xlu0 %330
        %332 = vst.msk [vmem:[%s271] sm:$0xff] %vm317, %v331
        %s333 = sand.u32 %s95, 1
        %s334 = scalar_lea.sflag [#allocation3], %s333
        %s335 = sand.u32 %s95, 1
        %s336 = smul.addr %s335, 8
        %s337 = scalar_lea.vmem [#allocation2], %s336
        %p338 = scmp.lt.s32.totalorder %s23, 1
        %s339 = scalar_select %p338, %s23, 1
        %p340 = scmp.lt.s32.totalorder %s24, 0
        %s341 = scalar_select %p340, %s24, 0
        %s342 = sadd.s32 %s341, %s339
        %s343 = smul.addr %s342, 8
        %s344 = scalar_lea.vmem %s3, %s343
        %p345 = scmp.lt.s32.totalorder %s23, 1
        %s346 = scalar_select %p345, %s23, 1
        %p347 = scmp.lt.s32.totalorder %s24, 0
        %s348 = scalar_select %p347, %s24, 0
        %s349 = sadd.s32 %s348, %s346
        %s350 = smul.addr %s349, 8
        %s351 = scalar_lea.vmem %s4, %s350
        // Predicated region
        $region29: #{qfnn_layer.3} parent=27 // pred_check
          %p352 = pneg %p105
        $region30: #{qfnn_layer.3} parent=27 // pred_check_branch
          %354 = sbr.rel (%p352) target = $region32
        $region31: #{qfnn_layer.3} parent=27 // pred_region
          %s356 = ssub.s32 128, 128
          %357 = vsyncadd %s334, %s356
          %s358 = sadd.s32 %s24, %s23
          %s359 = smul.addr %s358, 128
          %s360 = scalar_lea.hbm %s2, %s359
          %s362 = sshll.u32 %s337, 4
          %s363 = int_to_ptr.vmem [resolvable:$true] %s362
          %365 = dma.vmem_to_hbm [thread:$0]  %s363, 128, %s360, %s334
        $region32: #{qfnn_layer.3} parent=27 // pred_fallthru
          _
        // Predicated region
        $region33: #{qfnn_layer.3} parent=27 // pred_check
          %p366 = pneg %p133
        $region34: #{qfnn_layer.3} parent=27 // pred_check_branch
          %368 = sbr.rel (%p366) target = $region36
        $region35: #{qfnn_layer.3} parent=27 // pred_region
          _
        $region36: #{qfnn_layer.3} parent=27 // pred_fallthru
          _
        // Predicated region
        $region37: #{qfnn_layer.3} parent=27 // pred_check
          %p369 = pneg %p161
        $region38: #{qfnn_layer.3} parent=27 // pred_check_branch
          %371 = sbr.rel (%p369) target = $region40
        $region39: #{qfnn_layer.3} parent=27 // pred_region
          _
        $region40: #{qfnn_layer.3} parent=27 // pred_fallthru
          _
      $region28: #{qfnn_layer.3} parent=5 // pred_fallthru
        _
      %p372 = scmp.le.s32.totalorder 2, %s14
      // Predicated region
      $region41: #{qfnn_layer.3} parent=5 // pred_check
        %p373 = pneg %p372
      $region42: #{qfnn_layer.3} parent=5 // pred_check_branch
        %375 = sbr.rel (%p373) target = $region44
      $region43: #{qfnn_layer.3} parent=5 // pred_region
        %s376 = ssub.s32 %s14, 2
        // Predicated region
        $region45: #{qfnn_layer.3} parent=43 // pred_check
          %p377 = pneg %p111
        $region46: #{qfnn_layer.3} parent=43 // pred_check_branch
          %379 = sbr.rel (%p377) target = $region48
        $region47: #{qfnn_layer.3} parent=43 // pred_region
          %s380 = sand.u32 %s96, 1
          %s381 = scalar_lea.sflag [#allocation3], %s380
          %s382 = sand.u32 %s96, 1
          %s383 = smul.addr %s382, 8
          %s384 = scalar_lea.vmem [#allocation2], %s383
          %385 = dma.done %s381, 128
        $region48: #{qfnn_layer.3} parent=43 // pred_fallthru
          _
        // Predicated region
        $region49: #{qfnn_layer.3} parent=43 // pred_check
          %p386 = pneg %p139
        $region50: #{qfnn_layer.3} parent=43 // pred_check_branch
          %388 = sbr.rel (%p386) target = $region52
        $region51: #{qfnn_layer.3} parent=43 // pred_region
          %p389 = scmp.lt.s32.totalorder %s25, 1
          %s390 = scalar_select %p389, %s25, 1
          %p391 = scmp.lt.s32.totalorder %s26, 0
          %s392 = scalar_select %p391, %s26, 0
          %s393 = sadd.s32 %s392, %s390
          %s394 = smul.addr %s393, 8
          %s395 = scalar_lea.vmem %s3, %s394
        $region52: #{qfnn_layer.3} parent=43 // pred_fallthru
          _
        // Predicated region
        $region53: #{qfnn_layer.3} parent=43 // pred_check
          %p396 = pneg %p167
        $region54: #{qfnn_layer.3} parent=43 // pred_check_branch
          %398 = sbr.rel (%p396) target = $region56
        $region55: #{qfnn_layer.3} parent=43 // pred_region
          %p399 = scmp.lt.s32.totalorder %s25, 1
          %s400 = scalar_select %p399, %s25, 1
          %p401 = scmp.lt.s32.totalorder %s26, 0
          %s402 = scalar_select %p401, %s26, 0
          %s403 = sadd.s32 %s402, %s400
          %s404 = smul.addr %s403, 8
          %s405 = scalar_lea.vmem %s4, %s404
        $region56: #{qfnn_layer.3} parent=43 // pred_fallthru
          _
      $region44: #{qfnn_layer.3} parent=5 // pred_fallthru
        _
    $region6: #{qfnn_layer.3} parent=1 // loop_footer
      %s18 = sadd.s32 1, %s14
    $region7: #{qfnn_layer.3} parent=1 // loop_footer_branch
      %13 = sbr.rel target = $region3
    $region8: #{qfnn_layer.3} parent=1 // loop_exit
      _
    %406 = vsyncpa [#allocation3], 1
    %s407 = scalar_lea.sflag [#allocation3], 1
    %408 = vsyncpa %s407, 1

// kernel: qfnn_layer.4
$region0: #{qfnn_layer.4}
  #allocation0 [shape = 'u32[]', space=smem, size = 0x4, offset = 0x4, fixed_abs, tag = 'smem constant byte address 0x4 - core index']
  #allocation1 [shape = 'u32[144,128]{1,0:T(1,128)}', space=vmem, size = 0x12000, scoped, tag = 'internal scratch']
  %s0 = inlined_call_operand.vmem [shape: f32[2,4,8], index: 0, kind: input, shape index: {}]
  %s1 = inlined_call_operand.vmem [shape: f32[2,8,2], index: 1, kind: input, shape index: {}]
  %s2 = inlined_call_operand.vmem [shape: f32[2,8,2], index: 2, kind: output, shape index: {}]
  %s3 = sld [smem:[#allocation0]]
  $region41: #{qfnn_layer.4} parent=0
    _
  %s5 = ssub.s32 1, %s3
  %s6 = scalar_select 0, %s5, %s3
  loop: start=0, step=1, limit=4
  $region2: #{qfnn_layer.4} parent=0 // loop_pre_header
    _
  $region3: #{qfnn_layer.4} parent=0 // loop_header
    %s8 = sphi 0, %s12
    %p9 = scmp.ge.s32.totalorder %s8, 4
    %s15 = sphi 0, %s27
    %s16 = sphi 0, %s23
    %s17 = sphi 0, %s15
    %s18 = sphi 0, %s16
    %s19 = sphi 0, %s17
    %s20 = sphi 0, %s18
    %s30 = sphi 0, %s32
    %s33 = sphi 0, %s30
    %s34 = sphi 0, %s33
    %s50 = sphi 0, %s34
    %s58 = sphi 0, %s60
    %s61 = sphi 0, %s58
    %s62 = sphi 0, %s61
    %s78 = sphi 0, %s62
    %s86 = sphi 0, %s88
    %s89 = sphi 0, %s86
    %s90 = sphi 0, %s89
    %s106 = sphi 0, %s90
  $region4: #{qfnn_layer.4} parent=0 // loop_header_branch
    %11 = sbr.rel (%p9) target = $region8
  $region5: #{qfnn_layer.4} parent=0 // loop_body
    %s13 = ssub.s32 %s8, 1
    %s14 = ssub.s32 %s8, 2
    %s21 = sadd.s32 1, %s16
    %p22 = scmp.ge.s32.totalorder %s21, 1
    %s23 = scalar_select %p22, 0, %s21
    %s24 = sadd.s32 1, %s15
    %s25 = scalar_select %p22, %s24, %s15
    %p26 = scmp.ge.s32.totalorder %s25, 2
    %s27 = scalar_select %p26, 0, %s25
    %s28 = ssub.s32 %s15, %s27
    %p29 = scmp.eq.s32.totalorder %s28, 0
    %s31 = sadd.s32 %s30, 1
    %s32 = scalar_select %p29, %s30, %s31
    %p35 = pneg %p29
    %p36 = scmp.eq.s32.totalorder %s8, 1
    %p37 = por %p35, %p36
    %p38 = scmp.ne.s32.totalorder %s30, %s33
    %p39 = scmp.eq.s32.totalorder %s8, 0
    %p40 = por %p38, %p39
    %p41 = scmp.ne.s32.totalorder %s30, %s33
    %p42 = scmp.eq.s32.totalorder %s13, 1
    %p43 = por %p41, %p42
    %p44 = scmp.ne.s32.totalorder %s33, %s34
    %p45 = scmp.eq.s32.totalorder %s13, 0
    %p46 = por %p44, %p45
    %p47 = scmp.ne.s32.totalorder %s33, %s34
    %p48 = scmp.eq.s32.totalorder %s14, 1
    %p49 = por %p47, %p48
    %p51 = scmp.ne.s32.totalorder %s34, %s50
    %p52 = scmp.eq.s32.totalorder %s14, 0
    %p53 = por %p51, %p52
    %s54 = ssub.s32 %s15, %s27
    %s55 = ssub.s32 %s16, %s23
    %s56 = sor.u32 %s54, %s55
    %p57 = scmp.eq.s32.totalorder %s56, 0
    %s59 = sadd.s32 %s58, 1
    %s60 = scalar_select %p57, %s58, %s59
    %p63 = pneg %p57
    %p64 = scmp.eq.s32.totalorder %s8, 1
    %p65 = por %p63, %p64
    %p66 = scmp.ne.s32.totalorder %s58, %s61
    %p67 = scmp.eq.s32.totalorder %s8, 0
    %p68 = por %p66, %p67
    %p69 = scmp.ne.s32.totalorder %s58, %s61
    %p70 = scmp.eq.s32.totalorder %s13, 1
    %p71 = por %p69, %p70
    %p72 = scmp.ne.s32.totalorder %s61, %s62
    %p73 = scmp.eq.s32.totalorder %s13, 0
    %p74 = por %p72, %p73
    %p75 = scmp.ne.s32.totalorder %s61, %s62
    %p76 = scmp.eq.s32.totalorder %s14, 1
    %p77 = por %p75, %p76
    %p79 = scmp.ne.s32.totalorder %s62, %s78
    %p80 = scmp.eq.s32.totalorder %s14, 0
    %p81 = por %p79, %p80
    %s82 = ssub.s32 %s15, %s27
    %s83 = ssub.s32 %s16, %s23
    %s84 = sor.u32 %s82, %s83
    %p85 = scmp.eq.s32.totalorder %s84, 0
    %s87 = sadd.s32 %s86, 1
    %s88 = scalar_select %p85, %s86, %s87
    %p91 = pneg %p85
    %p92 = scmp.eq.s32.totalorder %s8, 1
    %p93 = por %p91, %p92
    %p94 = scmp.ne.s32.totalorder %s86, %s89
    %p95 = scmp.eq.s32.totalorder %s8, 0
    %p96 = por %p94, %p95
    %p97 = scmp.ne.s32.totalorder %s86, %s89
    %p98 = scmp.eq.s32.totalorder %s13, 1
    %p99 = por %p97, %p98
    %p100 = scmp.ne.s32.totalorder %s89, %s90
    %p101 = scmp.eq.s32.totalorder %s13, 0
    %p102 = por %p100, %p101
    %p103 = scmp.ne.s32.totalorder %s89, %s90
    %p104 = scmp.eq.s32.totalorder %s14, 1
    %p105 = por %p103, %p104
    %p107 = scmp.ne.s32.totalorder %s90, %s106
    %p108 = scmp.eq.s32.totalorder %s14, 0
    %p109 = por %p107, %p108
    %p110 = scmp.le.s32.totalorder 1, %s8
    %p111 = scmp.lt.s32.totalorder %s8, 3
    %p112 = pnand %p110, %p111
    %p113 = pneg %p112
    // Predicated region
    $region9: #{qfnn_layer.4} parent=5 // pred_check
      _
    $region10: #{qfnn_layer.4} parent=5 // pred_check_branch
      %115 = sbr.rel (%p112) target = $region12
    $region11: #{qfnn_layer.4} parent=5 // pred_region
      %s116 = ssub.s32 %s8, 1
    $region12: #{qfnn_layer.4} parent=5 // pred_fallthru
      _
    %p117 = scmp.lt.s32.totalorder %s8, 2
    // Predicated region
    $region13: #{qfnn_layer.4} parent=5 // pred_check
      %p118 = pneg %p117
    $region14: #{qfnn_layer.4} parent=5 // pred_check_branch
      %120 = sbr.rel (%p118) target = $region16
    $region15: #{qfnn_layer.4} parent=5 // pred_region
      // Predicated region
      $region17: #{qfnn_layer.4} parent=15 // pred_check
        %p121 = pneg %p40
      $region18: #{qfnn_layer.4} parent=15 // pred_check_branch
        %123 = sbr.rel (%p121) target = $region20
      $region19: #{qfnn_layer.4} parent=15 // pred_region
        %p124 = scmp.lt.s32.totalorder %s15, 1
        %s125 = scalar_select %p124, %s15, 1
        %s126 = smul.addr %s125, 4
        %s127 = scalar_lea.vmem %s0, %s126
      $region20: #{qfnn_layer.4} parent=15 // pred_fallthru
        _
      // Predicated region
      $region21: #{qfnn_layer.4} parent=15 // pred_check
        %p128 = pneg %p68
      $region22: #{qfnn_layer.4} parent=15 // pred_check_branch
        %130 = sbr.rel (%p128) target = $region24
      $region23: #{qfnn_layer.4} parent=15 // pred_region
        %p131 = scmp.lt.s32.totalorder %s15, 1
        %s132 = scalar_select %p131, %s15, 1
        %p133 = scmp.lt.s32.totalorder %s16, 0
        %s134 = scalar_select %p133, %s16, 0
        %s135 = sadd.s32 %s134, %s132
        %s136 = smul.addr %s135, 8
        %s137 = scalar_lea.vmem %s1, %s136
      $region24: #{qfnn_layer.4} parent=15 // pred_fallthru
        _
    $region16: #{qfnn_layer.4} parent=5 // pred_fallthru
      _
    %p138 = scmp.le.s32.totalorder 1, %s8
    %p139 = scmp.lt.s32.totalorder %s8, 3
    %p140 = pnand %p138, %p139
    %p141 = pneg %p140
    // Predicated region
    $region25: #{qfnn_layer.4} parent=5 // pred_check
      _
    $region26: #{qfnn_layer.4} parent=5 // pred_check_branch
      %143 = sbr.rel (%p140) target = $region28
    $region27: #{qfnn_layer.4} parent=5 // pred_region
      %s144 = ssub.s32 %s8, 1
      %p145 = scmp.lt.s32.totalorder %s17, 1
      %s146 = scalar_select %p145, %s17, 1
      %s147 = smul.addr %s146, 4
      %s148 = scalar_lea.vmem %s0, %s147
      %p149 = pneg %p46
      %p150 = pneg %p43
      %p151 = scmp.lt.s32.totalorder %s17, 1
      %s152 = scalar_select %p151, %s17, 1
      %p153 = scmp.lt.s32.totalorder %s18, 0
      %s154 = scalar_select %p153, %s18, 0
      %s155 = sadd.s32 %s154, %s152
      %s156 = smul.addr %s155, 8
      %s157 = scalar_lea.vmem %s1, %s156
      %p158 = pneg %p74
      %p159 = pneg %p71
      %p160 = pneg %p102
      %p161 = pneg %p99
      %p162 = scmp.lt.s32.totalorder %s17, 1
      %s163 = scalar_select %p162, %s17, 1
      %p164 = scmp.lt.s32.totalorder %s18, 0
      %s165 = scalar_select %p164, %s18, 0
      %s166 = sadd.s32 %s165, %s163
      %s167 = smul.addr %s166, 8
      %s168 = scalar_lea.vmem %s2, %s167
      %p169 = scmp.lt.s32.totalorder %s17, 1
      %s170 = scalar_select %p169, %s17, 1
      %s171 = smul.addr %s170, 4
      %s172 = scalar_lea.vmem %s0, %s171
      %p173 = scmp.lt.s32.totalorder %s17, 1
      %s174 = scalar_select %p173, %s17, 1
      %p175 = scmp.lt.s32.totalorder %s18, 0
      %s176 = scalar_select %p175, %s18, 0
      %s177 = sadd.s32 %s176, %s174
      %s178 = smul.addr %s177, 8
      %s179 = scalar_lea.vmem %s1, %s178
      %p180 = scmp.lt.s32.totalorder %s17, 1
      %s181 = scalar_select %p180, %s17, 1
      %p182 = scmp.lt.s32.totalorder %s18, 0
      %s183 = scalar_select %p182, %s18, 0
      %s184 = sadd.s32 %s183, %s181
      %s185 = smul.addr %s184, 8
      %s186 = scalar_lea.vmem %s2, %s185
      %v187 = vld [vmem:[%s179] sm:$0xff]
      %v188 = vld [vmem:[%s172] sm:$0x1]
      %v189 = vld [vmem:[%s172 + $0x1] sm:$0x1]
      %191 = vset.pattern.permute.xlu0 0
      %192 = vperm.xlu0 %191, %v187
      %v193 = vpop.permute.xlu0 %192
      %v195 = vlaneseq
      %v196 = vshrl.u32 %v195, 7
      %v197 = vsub.s32 0, %v196
      %v198 = vrot.slane %v188, %v197
      %v199 = vmul.f32 %v193, %v198
      %200 = vset.pattern.permute.xlu0 1
      %201 = vperm.xlu0 %200, %v187
      %v202 = vpop.permute.xlu0 %201
      %v204 = vlaneseq
      %v205 = vshrl.u32 %v204, 7
      %v206 = vsub.s32 0, %v205
      %v207 = vrot.slane %v189, %v206
      %v208 = vmul.f32 %v202, %v207
      %v209 = vadd.f32 %v199, %v208
      %v210 = vand.u32 2147483647, %v209
      %v211 = vadd.f32 %v210, 1e-05
      %v212 = vrcp.pop %v211
      %v213 = vmul.f32 %v211, %v212
      %v214 = vsub.f32 2.0, %v213
      %v215 = vmul.f32 %v212, %v214
      %vm216 = vcmp.lt.f32.partialorder %v210, 1.99999
      %v217 = vmul.f32 %v209, %v215
      %v218 = vsel %vm216, %v217, 0.0
      %v219 = vld [vmem:[%s172 + $0x2] sm:$0x1]
      %v220 = vlaneseq
      %v221 = vshrl.u32 %v220, 7
      %v222 = vsub.s32 0, %v221
      %v223 = vrot.slane %v219, %v222
      %v224 = vmul.f32 %v218, %v223
      %vm225 = vcmask 64512
      %v226 = vsel %vm225, %v224, 0.0
      %227 = vadd.xlane.f32.xlu0 %v226
      %v228 = vpop.xlane.xlu0 %227
      %vm229 = vcmask 7168
      %230 = vst.msk [vmem:[%s186] sm:$0xff] %vm229, %v228
      %v231 = vld [vmem:[%s172 + $0x3] sm:$0x1]
      %v232 = vlaneseq
      %v233 = vshrl.u32 %v232, 7
      %v234 = vsub.s32 0, %v233
      %v235 = vrot.slane %v231, %v234
      %v236 = vmul.f32 %v218, %v235
      %v237 = vsel %vm225, %v236, 0.0
      %238 = vadd.xlane.f32.xlu0 %v237
      %v239 = vpop.xlane.xlu0 %238
      %vm240 = vcmask 15368
      %241 = vst.msk [vmem:[%s186] sm:$0xff] %vm240, %v239
      %p242 = scmp.lt.s32.totalorder %s17, 1
      %s243 = scalar_select %p242, %s17, 1
      %p244 = scmp.lt.s32.totalorder %s18, 0
      %s245 = scalar_select %p244, %s18, 0
      %s246 = sadd.s32 %s245, %s243
      %s247 = smul.addr %s246, 8
      %s248 = scalar_lea.vmem %s2, %s247
      // Predicated region
      $region29: #{qfnn_layer.4} parent=27 // pred_check
        %p249 = pneg %p99
      $region30: #{qfnn_layer.4} parent=27 // pred_check_branch
        %251 = sbr.rel (%p249) target = $region32
      $region31: #{qfnn_layer.4} parent=27 // pred_region
        _
      $region32: #{qfnn_layer.4} parent=27 // pred_fallthru
        _
    $region28: #{qfnn_layer.4} parent=5 // pred_fallthru
      _
    %p252 = scmp.le.s32.totalorder 2, %s8
    // Predicated region
    $region33: #{qfnn_layer.4} parent=5 // pred_check
      %p253 = pneg %p252
    $region34: #{qfnn_layer.4} parent=5 // pred_check_branch
      %255 = sbr.rel (%p253) target = $region36
    $region35: #{qfnn_layer.4} parent=5 // pred_region
      %s256 = ssub.s32 %s8, 2
      // Predicated region
      $region37: #{qfnn_layer.4} parent=35 // pred_check
        %p257 = pneg %p105
      $region38: #{qfnn_layer.4} parent=35 // pred_check_branch
        %259 = sbr.rel (%p257) target = $region40
      $region39: #{qfnn_layer.4} parent=35 // pred_region
        %p260 = scmp.lt.s32.totalorder %s19, 1
        %s261 = scalar_select %p260, %s19, 1
        %p262 = scmp.lt.s32.totalorder %s20, 0
        %s263 = scalar_select %p262, %s20, 0
        %s264 = sadd.s32 %s263, %s261
        %s265 = smul.addr %s264, 8
        %s266 = scalar_lea.vmem %s2, %s265
      $region40: #{qfnn_layer.4} parent=35 // pred_fallthru
        _
    $region36: #{qfnn_layer.4} parent=5 // pred_fallthru
      _
  $region6: #{qfnn_layer.4} parent=0 // loop_footer
    %s12 = sadd.s32 1, %s8
  $region7: #{qfnn_layer.4} parent=0 // loop_footer_branch
    %7 = sbr.rel target = $region3
  $region8: #{qfnn_layer.4} parent=0 // loop_exit
    _

</llo_original>
